<compile_context>
chip_gen: v6e
topology: v6e:2x2x1
jax: 0.10.0
libtpu: 0.0.40
codegen_flags: <defaults>
</compile_context>

<pallas_src>
import functools

import jax
import jax.numpy as jnp
from jax.experimental import pallas as pl
from jax.experimental.pallas import tpu as pltpu


# ------------------------------ block sizing ------------------------------- #

def _pick_samples_per_block(N, C, HW_padded, itemsize=4, target_bytes=1 << 21):
    """Largest divisor B of N whose (B*C, HW) block stays under ~2 MiB and whose
    row count B*C fills whole 8-sublane tiles (or covers the full array)."""
    best = 1
    for b in range(1, N + 1):
        if N % b:
            continue
        legal = ((b * C) % 8 == 0) or (b == N)   # (8,128) rule: mult. of 8 or full dim
        if not legal:
            continue
        if b * C * HW_padded * itemsize <= target_bytes:
            best = b
    if best == 1 and (C % 8 != 0) and N > 1:
        # No sublane-full divisor fit the target; a single full-array block is
        # always layout-legal and avoids half-empty vregs.
        best = N
    return best


# ------------------------------ Pallas kernel ------------------------------ #

def _scse_kernel(x_ref, w_ref, o_ref, *, B, C, Ch, inv_hw):
    # x_ref / o_ref block: (B*C, HWp) -- B samples packed along the sublane axis,
    # pixels on the lane-dense (multiple-of-128) axis.
    xf = x_ref[...]                                   # (B*C, HWp) f32
    w = w_ref[...]                                    # (C, 2*Ch + 1) packed weights
    w_sqT = w[:, :Ch]                                 # (C, Ch) == Conv_Squeeze.weight.T
    w_ex = w[:, Ch:2 * Ch]                            # (C, Ch) == Conv_Excitation.weight
    w_sse = w[:, 2 * Ch:2 * Ch + 1]                   # (C, 1)  == sSE 1x1 conv weight

    # Global average pool over pixels for every (sample, channel) row at once.
    # Zero lane-padding does not change the sum; divide by the true pixel count.
    pooled = jnp.sum(xf, axis=1, keepdims=True) * inv_hw        # (B*C, 1)

    # Tiny per-sample gate math (C, Ch are a handful of elements): static unroll.
    gate_rows = []
    for b in range(B):
        x_b = xf[b * C:(b + 1) * C, :]                          # (C, HWp)
        p_b = pooled[b * C:(b + 1) * C, :]                      # (C, 1)
        # cSE: hidden = relu(W_sq @ pooled); z = sigmoid(W_ex @ hidden)
        h_b = jnp.maximum(
            jnp.sum(w_sqT * p_b, axis=0, keepdims=True), 0.0)   # (1, Ch)
        z_b = jax.nn.sigmoid(
            jnp.sum(w_ex * h_b, axis=1, keepdims=True))         # (C, 1)
        # sSE: per-pixel gate q = sigmoid(W_sse . x)
        q_b = jax.nn.sigmoid(
            jnp.sum(w_sse * x_b, axis=0, keepdims=True))        # (1, HWp)
        gate_rows.append(z_b + q_b)                             # (C, HWp)
    gate = gate_rows[0] if B == 1 else jnp.concatenate(gate_rows, axis=0)

    # U*z + U*q == U*(z+q): one sublane-full, lane-dense elementwise pass.
    o_ref[...] = xf * gate


# -------------------------------- wrapper ---------------------------------- #

@jax.jit
def scse_forward(x_nchw, w_squeeze, w_excite, w_sse):
    """scSE forward.

    x_nchw:    (N, C, H, W)      float32
    w_squeeze: (C//2, C, 1, 1)   Conv_Squeeze weight (bias-free)
    w_excite:  (C, C//2, 1, 1)   Conv_Excitation weight (bias-free)
    w_sse:     (1, C, 1, 1)      sSE 1x1 conv weight (bias-free)
    """
    N, C, H, W = x_nchw.shape
    Ch = C // 2
    HW = H * W
    HWp = ((HW + 127) // 128) * 128          # lane-dense pixel axis

    x3 = x_nchw.reshape(N, C, HW).astype(jnp.float32)
    if HWp != HW:
        x3 = jnp.pad(x3, ((0, 0), (0, 0), (0, HWp - HW)))
    x2 = x3.reshape(N * C, HWp)              # samples packed along sublanes

    # Pack the three tiny weights into one operand -> one BlockSpec / pipeline.
    w_sqT = w_squeeze.reshape(Ch, C).T                           # (C, Ch)
    w_exm = w_excite.reshape(C, Ch)                              # (C, Ch)
    w_ssec = w_sse.reshape(1, C).T                               # (C, 1)
    w_packed = jnp.concatenate(
        [w_sqT, w_exm, w_ssec], axis=1).astype(jnp.float32)      # (C, 2*Ch+1)

    B = _pick_samples_per_block(N, C, HWp)
    block_rows = B * C
    block_bytes = block_rows * HWp * 4
    grid = (N // B,)

    out2 = pl.pallas_call(
        functools.partial(_scse_kernel, B=B, C=C, Ch=Ch, inv_hw=1.0 / HW),
        out_shape=jax.ShapeDtypeStruct((N * C, HWp), jnp.float32),
        grid=grid,
        in_specs=[
            pl.BlockSpec((block_rows, HWp), lambda n: (n, 0)),   # B samples / step
            pl.BlockSpec((C, 2 * Ch + 1), lambda n: (0, 0)),     # packed weights
        ],
        out_specs=pl.BlockSpec((block_rows, HWp), lambda n: (n, 0)),
        compiler_params=pltpu.CompilerParams(
            dimension_semantics=("parallel",),
            # Keep double-buffered in/out blocks comfortably inside VMEM on
            # every generation (64 MiB total on v7x).
            vmem_limit_bytes=int(min(32 << 20, max(4 << 20, 6 * block_bytes))),
        ),
    )(x2, w_packed)

    out = out2.reshape(N, C, HWp)[:, :, :HW].reshape(N, C, H, W)
    return out.astype(x_nchw.dtype)


# --------------------------- pure-JAX reference ----------------------------- #

def ref_forward(x, w_squeeze, w_excite, w_sse):
    N, C, H, W = x.shape
    w_sq_m = w_squeeze.reshape(C // 2, C)
    w_ex_m = w_excite.reshape(C, C // 2)
    w_sse_v = w_sse.reshape(C)

    # sSE
    q = jax.nn.sigmoid(jnp.einsum("nchw,c->nhw", x, w_sse_v))
    u_sse = x * q[:, None, :, :]

    # cSE
    pooled = jnp.mean(x, axis=(2, 3))                       # (N, C)
    hidden = jax.nn.relu(pooled @ w_sq_m.T)                 # (N, C//2)
    z = jax.nn.sigmoid(hidden @ w_ex_m.T)                   # (N, C)
    u_cse = x * z[:, :, None, None]

    return u_cse + u_sse


# ---------------------------------- main ------------------------------------ #

if __name__ == "__main__":
    key = jax.random.PRNGKey(0)
    k0, k1, k2, k3 = jax.random.split(key, 4)

    N, C, H, W = 2, 4, 16, 16        # in_channels = 4  ->  squeeze dim = 2

    U = jax.random.normal(k0, (N, C, H, W), jnp.float32)
    w_squeeze = 0.3 * jax.random.normal(k1, (C // 2, C, 1, 1), jnp.float32)
    w_excite = 0.3 * jax.random.normal(k2, (C, C // 2, 1, 1), jnp.float32)
    w_sse = 0.3 * jax.random.normal(k3, (1, C, 1, 1), jnp.float32)

    out = jax.block_until_ready(scse_forward(U, w_squeeze, w_excite, w_sse))
    ref = jax.block_until_ready(ref_forward(U, w_squeeze, w_excite, w_sse))

    assert out.shape == ref.shape == (N, C, H, W)
    err = float(jnp.max(jnp.abs(out - ref)))
    assert err < 1e-4, f"max abs mismatch vs reference: {err}"
    print("KERNEL_OK")
</pallas_src>

<mosaic_0001>
module attributes {stable_mosaic.version = 11 : i64} {
  func.func @_scse_kernel(%arg0: i32, %arg1: memref<8x256xf32, #tpu.memory_space<vmem>>, %arg2: memref<4x5xf32, #tpu.memory_space<vmem>>, %arg3: memref<8x256xf32, #tpu.memory_space<vmem>>) attributes {dimension_semantics = [#tpu.dimension_semantics<parallel>], iteration_bounds = array<i64: 1>, scalar_prefetch = 0 : i64, scratch_operands = 0 : i64, tpu.core_type = #tpu.core_type<tc>, window_params = [{transform_indices = @transform_0, window_bounds = array<i64: 8, 256>}, {pipeline_mode = #tpu.pipeline_mode<synchronous>, transform_indices = @transform_1, window_bounds = array<i64: 4, 5>}, {transform_indices = @transform_2, window_bounds = array<i64: 8, 256>}]} {
    %c0 = arith.constant 0 : index
    %c0_0 = arith.constant 0 : index
    %0 = vector.load %arg1[%c0, %c0_0] : memref<8x256xf32, #tpu.memory_space<vmem>>, vector<8x256xf32>
    %c0_1 = arith.constant 0 : index
    %c0_2 = arith.constant 0 : index
    %1 = vector.load %arg2[%c0_1, %c0_2] : memref<4x5xf32, #tpu.memory_space<vmem>>, vector<4x5xf32>
    %2 = vector.extract_strided_slice %1 {offsets = [0, 0], sizes = [4, 2], strides = [1, 1]} : vector<4x5xf32> to vector<4x2xf32>
    %3 = vector.extract_strided_slice %1 {offsets = [0, 2], sizes = [4, 2], strides = [1, 1]} : vector<4x5xf32> to vector<4x2xf32>
    %4 = vector.extract_strided_slice %1 {offsets = [0, 4], sizes = [4, 1], strides = [1, 1]} : vector<4x5xf32> to vector<4x1xf32>
    %cst = arith.constant dense<0.000000e+00> : vector<8xf32>
    %5 = vector.multi_reduction <add>, %0, %cst [1] : vector<8x256xf32> to vector<8xf32>
    %6 = vector.shape_cast %5 : vector<8xf32> to vector<8x1xf32>
    %cst_3 = arith.constant 3.906250e-03 : f32
    %7 = vector.broadcast %cst_3 : f32 to vector<8x1xf32>
    %8 = arith.mulf %6, %7 : vector<8x1xf32>
    %9 = vector.extract_strided_slice %0 {offsets = [0, 0], sizes = [4, 256], strides = [1, 1]} : vector<8x256xf32> to vector<4x256xf32>
    %10 = vector.extract_strided_slice %8 {offsets = [0, 0], sizes = [4, 1], strides = [1, 1]} : vector<8x1xf32> to vector<4x1xf32>
    %11 = vector.broadcast %10 : vector<4x1xf32> to vector<4x2xf32>
    %12 = arith.mulf %2, %11 : vector<4x2xf32>
    %cst_4 = arith.constant dense<0.000000e+00> : vector<2xf32>
    %13 = vector.multi_reduction <add>, %12, %cst_4 [0] : vector<4x2xf32> to vector<2xf32>
    %14 = vector.shape_cast %13 : vector<2xf32> to vector<1x2xf32>
    %cst_5 = arith.constant 0.000000e+00 : f32
    %15 = vector.broadcast %cst_5 : f32 to vector<1x2xf32>
    %16 = arith.maximumf %14, %15 : vector<1x2xf32>
    %17 = vector.broadcast %16 : vector<1x2xf32> to vector<4x2xf32>
    %18 = arith.mulf %3, %17 : vector<4x2xf32>
    %cst_6 = arith.constant dense<0.000000e+00> : vector<4xf32>
    %19 = vector.multi_reduction <add>, %18, %cst_6 [1] : vector<4x2xf32> to vector<4xf32>
    %20 = vector.shape_cast %19 : vector<4xf32> to vector<4x1xf32>
    %21 = arith.negf %20 : vector<4x1xf32>
    %22 = math.exp %21 : vector<4x1xf32>
    %cst_7 = arith.constant 1.000000e+00 : f32
    %23 = vector.broadcast %cst_7 : f32 to vector<4x1xf32>
    %24 = arith.addf %23, %22 : vector<4x1xf32>
    %25 = arith.divf %23, %24 : vector<4x1xf32>
    %26 = vector.broadcast %4 : vector<4x1xf32> to vector<4x256xf32>
    %27 = arith.mulf %26, %9 : vector<4x256xf32>
    %cst_8 = arith.constant dense<0.000000e+00> : vector<256xf32>
    %28 = vector.multi_reduction <add>, %27, %cst_8 [0] : vector<4x256xf32> to vector<256xf32>
    %29 = vector.shape_cast %28 : vector<256xf32> to vector<1x256xf32>
    %30 = arith.negf %29 : vector<1x256xf32>
    %31 = math.exp %30 : vector<1x256xf32>
    %cst_9 = arith.constant 1.000000e+00 : f32
    %32 = vector.broadcast %cst_9 : f32 to vector<1x256xf32>
    %33 = arith.addf %32, %31 : vector<1x256xf32>
    %34 = arith.divf %32, %33 : vector<1x256xf32>
    %35 = vector.broadcast %25 : vector<4x1xf32> to vector<4x256xf32>
    %36 = vector.broadcast %34 : vector<1x256xf32> to vector<4x256xf32>
    %37 = arith.addf %35, %36 : vector<4x256xf32>
    %38 = vector.extract_strided_slice %0 {offsets = [4, 0], sizes = [4, 256], strides = [1, 1]} : vector<8x256xf32> to vector<4x256xf32>
    %39 = vector.extract_strided_slice %8 {offsets = [4, 0], sizes = [4, 1], strides = [1, 1]} : vector<8x1xf32> to vector<4x1xf32>
    %40 = vector.broadcast %39 : vector<4x1xf32> to vector<4x2xf32>
    %41 = arith.mulf %2, %40 : vector<4x2xf32>
    %cst_10 = arith.constant dense<0.000000e+00> : vector<2xf32>
    %42 = vector.multi_reduction <add>, %41, %cst_10 [0] : vector<4x2xf32> to vector<2xf32>
    %43 = vector.shape_cast %42 : vector<2xf32> to vector<1x2xf32>
    %cst_11 = arith.constant 0.000000e+00 : f32
    %44 = vector.broadcast %cst_11 : f32 to vector<1x2xf32>
    %45 = arith.maximumf %43, %44 : vector<1x2xf32>
    %46 = vector.broadcast %45 : vector<1x2xf32> to vector<4x2xf32>
    %47 = arith.mulf %3, %46 : vector<4x2xf32>
    %cst_12 = arith.constant dense<0.000000e+00> : vector<4xf32>
    %48 = vector.multi_reduction <add>, %47, %cst_12 [1] : vector<4x2xf32> to vector<4xf32>
    %49 = vector.shape_cast %48 : vector<4xf32> to vector<4x1xf32>
    %50 = arith.negf %49 : vector<4x1xf32>
    %51 = math.exp %50 : vector<4x1xf32>
    %cst_13 = arith.constant 1.000000e+00 : f32
    %52 = vector.broadcast %cst_13 : f32 to vector<4x1xf32>
    %53 = arith.addf %52, %51 : vector<4x1xf32>
    %54 = arith.divf %52, %53 : vector<4x1xf32>
    %55 = vector.broadcast %4 : vector<4x1xf32> to vector<4x256xf32>
    %56 = arith.mulf %55, %38 : vector<4x256xf32>
    %cst_14 = arith.constant dense<0.000000e+00> : vector<256xf32>
    %57 = vector.multi_reduction <add>, %56, %cst_14 [0] : vector<4x256xf32> to vector<256xf32>
    %58 = vector.shape_cast %57 : vector<256xf32> to vector<1x256xf32>
    %59 = arith.negf %58 : vector<1x256xf32>
    %60 = math.exp %59 : vector<1x256xf32>
    %cst_15 = arith.constant 1.000000e+00 : f32
    %61 = vector.broadcast %cst_15 : f32 to vector<1x256xf32>
    %62 = arith.addf %61, %60 : vector<1x256xf32>
    %63 = arith.divf %61, %62 : vector<1x256xf32>
    %64 = vector.broadcast %54 : vector<4x1xf32> to vector<4x256xf32>
    %65 = vector.broadcast %63 : vector<1x256xf32> to vector<4x256xf32>
    %66 = arith.addf %64, %65 : vector<4x256xf32>
    %67 = tpu.concatenate %37, %66 in 0 : vector<4x256xf32>, vector<4x256xf32> -> vector<8x256xf32>
    %68 = arith.mulf %0, %67 : vector<8x256xf32>
    %c0_16 = arith.constant 0 : index
    %c0_17 = arith.constant 0 : index
    %69 = vector.load %arg3[%c0_16, %c0_17] : memref<8x256xf32, #tpu.memory_space<vmem>>, vector<8x256xf32>
    tpu.vector_store %arg3[%c0_16, %c0_17], %68 {strides = array<i32>} : memref<8x256xf32, #tpu.memory_space<vmem>>, vector<8x256xf32>,
    return
  }
  func.func @transform_0(%arg0: i32) -> (i32, i32) {
    %c0_i32 = arith.constant 0 : i32
    %c0_i32_0 = arith.constant 0 : i32
    return %arg0, %c0_i32 : i32, i32
  }
  func.func @transform_1(%arg0: i32) -> (i32, i32) {
    %c0_i32 = arith.constant 0 : i32
    %c0_i32_0 = arith.constant 0 : i32
    %c0_i32_1 = arith.constant 0 : i32
    return %c0_i32, %c0_i32_0 : i32, i32
  }
  func.func @transform_2(%arg0: i32) -> (i32, i32) {
    %c0_i32 = arith.constant 0 : i32
    %c0_i32_0 = arith.constant 0 : i32
    return %arg0, %c0_i32 : i32, i32
  }
}

</mosaic_0001>

<llo_original>
// kernel: scse_forward.1
$region0: #{scse_forward.1}
  #allocation0 [shape = 'u32[]', space=smem, size = 0x4, offset = 0x4, fixed_abs, tag = 'smem constant byte address 0x4 - core index']
  #allocation1 [shape = 'u32[144,128]{1,0:T(1,128)}', space=vmem, size = 0x12000, scoped, tag = 'internal scratch']
  %s0 = inlined_call_operand.vmem [shape: f32[8,256], index: 0, kind: input, shape index: {}]
  %s1 = inlined_call_operand.vmem [shape: f32[4,5], index: 1, kind: input, shape index: {}]
  %s2 = inlined_call_operand.vmem [shape: f32[8,256], index: 2, kind: output, shape index: {}]
  %s3 = sld [smem:[#allocation0]]
  $region18: #{scse_forward.1} parent=0
    _
  %s5 = ssub.s32 1, %s3
  %s6 = scalar_select 0, %s5, %s3
  // Predicated region
  $region2: #{scse_forward.1} parent=0 // pred_check
    _
  $region3: #{scse_forward.1} parent=0 // pred_check_branch
    %8 = sbr.rel (0) target = $region5
  $region4: #{scse_forward.1} parent=0 // pred_region
    _
  $region5: #{scse_forward.1} parent=0 // pred_fallthru
    _
  // Predicated region
  $region6: #{scse_forward.1} parent=0 // pred_check
    _
  $region7: #{scse_forward.1} parent=0 // pred_check_branch
    %10 = sbr.rel (0) target = $region9
  $region8: #{scse_forward.1} parent=0 // pred_region
    _
  $region9: #{scse_forward.1} parent=0 // pred_fallthru
    _
  %v11 = vld [vmem:[%s0] sm:$0xff]
  %v12 = vld [vmem:[%s0 + $0x8] sm:$0xff]
  %v13 = vld [vmem:[%s1] sm:$0xf]
  %v14 = vadd.f32 %v11, %v12
  %15 = vadd.xlane.f32.xlu0 %v14
  %v16 = vpop.xlane.xlu0 %15
  %v17 = vmul.f32 %v16, 0.00390625
  %v18 = vmul.f32 %v13, %v17
  %vm19 = vcmask 11264
  %v20 = vsel %vm19, %v18, 0.0
  %v21 = vrot.slane %v20, 4
  %v22 = vadd.f32 %v20, %v21
  %v23 = vrot.slane %v22, 2
  %v24 = vadd.f32 %v22, %v23
  %v25 = vrot.slane %v24, 1
  %v26 = vadd.f32 %v24, %v25
  %v27 = vmax.f32 %v26, 0.0
  %29 = vrot.lane.b32.xlu0 %v27, 2
  %v30 = vpop.permute.xlu0 %29
  %v32 = vmul.f32 %v13, %v30
  %34 = vrot.lane.b32.xlu0 %v32, 126
  %v35 = vpop.permute.xlu0 %34
  %v37 = vsel %vm19, %v35, 0.0
  %38 = vadd.xlane.f32.xlu0 %v37
  %v39 = vpop.xlane.xlu0 %38
  %v40 = vxor.u32 %v39, 2147483648
  %v41 = vmul.f32 %v40, 1.442695
  %v42 = vpow.pop %v41
  %v43 = vadd.f32 %v42, 1.0
  %v44 = vrcp.pop %v43
  %v45 = vmul.f32 1.0, %v44
  %47 = vset.pattern.permute.xlu0 4
  %48 = vperm.xlu0 %47, %v13
  %v49 = vpop.permute.xlu0 %48
  %v51 = vmul.f32 %v49, %v11
  %v52 = vmul.f32 %v49, %v12
  %vm53 = vcmask 1043456
  %v54 = vsel %vm53, %v51, 0.0
  %v55 = vrot.slane %v54, 4
  %v56 = vadd.f32 %v54, %v55
  %v57 = vrot.slane %v56, 2
  %v58 = vadd.f32 %v56, %v57
  %v59 = vrot.slane %v58, 1
  %v60 = vadd.f32 %v58, %v59
  %v61 = vsel %vm53, %v52, 0.0
  %v62 = vrot.slane %v61, 4
  %v63 = vadd.f32 %v61, %v62
  %v64 = vrot.slane %v63, 2
  %v65 = vadd.f32 %v63, %v64
  %v66 = vrot.slane %v65, 1
  %v67 = vadd.f32 %v65, %v66
  %v68 = vxor.u32 %v60, 2147483648
  %v69 = vxor.u32 %v67, 2147483648
  %v70 = vmul.f32 %v68, 1.442695
  %v71 = vpow.pop %v70
  %v72 = vmul.f32 %v69, 1.442695
  %v73 = vpow.pop %v72
  %v74 = vadd.f32 %v71, 1.0
  %v75 = vadd.f32 %v73, 1.0
  %v76 = vrcp.pop %v74
  %v77 = vmul.f32 1.0, %v76
  %v78 = vrcp.pop %v75
  %v79 = vmul.f32 1.0, %v78
  %v80 = vadd.f32 %v45, %v77
  %v81 = vadd.f32 %v45, %v79
  %v83 = vrot.slane %v17, 4
  %v85 = vmul.f32 %v13, %v83
  %v86 = vsel %vm19, %v85, 0.0
  %v87 = vrot.slane %v86, 4
  %v88 = vadd.f32 %v86, %v87
  %v89 = vrot.slane %v88, 2
  %v90 = vadd.f32 %v88, %v89
  %v91 = vrot.slane %v90, 1
  %v92 = vadd.f32 %v90, %v91
  %v93 = vmax.f32 %v92, 0.0
  %95 = vrot.lane.b32.xlu0 %v93, 2
  %v96 = vpop.permute.xlu0 %95
  %v98 = vmul.f32 %v13, %v96
  %100 = vrot.lane.b32.xlu0 %v98, 126
  %v101 = vpop.permute.xlu0 %100
  %v103 = vsel %vm19, %v101, 0.0
  %104 = vadd.xlane.f32.xlu0 %v103
  %v105 = vpop.xlane.xlu0 %104
  %v106 = vxor.u32 %v105, 2147483648
  %v107 = vmul.f32 %v106, 1.442695
  %v108 = vpow.pop %v107
  %v109 = vadd.f32 %v108, 1.0
  %v110 = vrcp.pop %v109
  %v111 = vmul.f32 1.0, %v110
  %v114 = vrot.slane %v11, 4
  %v115 = vrot.slane %v12, 4
  %v118 = vmul.f32 %v49, %v114
  %v119 = vmul.f32 %v49, %v115
  %v120 = vsel %vm53, %v118, 0.0
  %v121 = vrot.slane %v120, 4
  %v122 = vadd.f32 %v120, %v121
  %v123 = vrot.slane %v122, 2
  %v124 = vadd.f32 %v122, %v123
  %v125 = vrot.slane %v124, 1
  %v126 = vadd.f32 %v124, %v125
  %v127 = vsel %vm53, %v119, 0.0
  %v128 = vrot.slane %v127, 4
  %v129 = vadd.f32 %v127, %v128
  %v130 = vrot.slane %v129, 2
  %v131 = vadd.f32 %v129, %v130
  %v132 = vrot.slane %v131, 1
  %v133 = vadd.f32 %v131, %v132
  %v134 = vxor.u32 %v126, 2147483648
  %v135 = vxor.u32 %v133, 2147483648
  %v136 = vmul.f32 %v134, 1.442695
  %v137 = vpow.pop %v136
  %v138 = vmul.f32 %v135, 1.442695
  %v139 = vpow.pop %v138
  %v140 = vadd.f32 %v137, 1.0
  %v141 = vadd.f32 %v139, 1.0
  %v142 = vrcp.pop %v140
  %v143 = vmul.f32 1.0, %v142
  %v144 = vrcp.pop %v141
  %v145 = vmul.f32 1.0, %v144
  %v146 = vadd.f32 %v111, %v143
  %v147 = vadd.f32 %v111, %v145
  %v150 = vrot.slane %v146, 4
  %v151 = vrot.slane %v147, 4
  %v154 = vsel %vm53, %v80, %v150
  %v155 = vsel %vm53, %v81, %v151
  %v156 = vmul.f32 %v11, %v154
  %v157 = vmul.f32 %v12, %v155
  %158 = vst [vmem:[%s2] sm:$0xff] %v156
  %159 = vst [vmem:[%s2 + $0x8] sm:$0xff] %v157
  // Predicated region
  $region10: #{scse_forward.1} parent=0 // pred_check
    _
  $region11: #{scse_forward.1} parent=0 // pred_check_branch
    %161 = sbr.rel (0) target = $region13
  $region12: #{scse_forward.1} parent=0 // pred_region
    _
  $region13: #{scse_forward.1} parent=0 // pred_fallthru
    _
  // Predicated region
  $region14: #{scse_forward.1} parent=0 // pred_check
    _
  $region15: #{scse_forward.1} parent=0 // pred_check_branch
    %163 = sbr.rel (0) target = $region17
  $region16: #{scse_forward.1} parent=0 // pred_region
    _
  $region17: #{scse_forward.1} parent=0 // pred_fallthru
    _

</llo_original>
